<compile_context>
chip_gen: v6e
topology: v6e:2x2x1
jax: 0.10.0
libtpu: 0.0.40
codegen_flags: <defaults>
</compile_context>

<pallas_src>
import jax
import jax.numpy as jnp
from jax.experimental import pallas as pl
from jax.experimental.pallas import tpu as pltpu

LANES = 128


# ----------------------------------------------------------------------------
# Pallas kernel: full forward for Bt graphs (one grid step of the batch).
# ----------------------------------------------------------------------------
def _disc_kernel(adj_ref, x_ref, apool_ref, w_ref, b_ref, out_ref):
    # adj_ref:   (Bt, N, N)        bf16  normalized adjacency per graph
    # x_ref:     (Bt*N, F_pad)     bf16  node features, batch-flattened rows
    # apool_ref: (Bt, N)           f32   precomputed mean-of-rows of A_hat
    # w_ref:     (F_pad+128, 128)  bf16  packed weights: [W1 ; Wmu@Wc1]
    # b_ref:     (8, 128)          f32   packed: b1, b_fold, wc2 row, bc2 (bcast)
    # out_ref:   (Bt, 128)         f32   lane-dense output; every lane = prob
    bt, n, _ = adj_ref.shape
    f_pad = w_ref.shape[0] - LANES

    adj = adj_ref[...]
    x = x_ref[...]
    a_pool = apool_ref[...]

    w1 = w_ref[0:f_pad, :]                    # (F_pad, 128) real cols [0, H)
    w_fold = w_ref[f_pad:f_pad + LANES, :]    # (128, 128)   real block [0,H)x[0,64)
    b1 = b_ref[0:1, :]                        # (1, 128)
    b_fold = b_ref[1:2, :]                    # (1, 128)
    wc2_row = b_ref[2:3, :]                   # (1, 128) real lanes [0, 64)
    bc2_row = b_ref[3:4, :]                   # (1, 128) bc2 replicated on all lanes

    # --- shared X @ W1: one full-row bf16 MXU matmul over all Bt*N node rows ---
    xw = jnp.dot(x, w1, preferred_element_type=jnp.float32)      # (Bt*N, 128) f32
    xw = xw.reshape(bt, n, LANES).astype(jnp.bfloat16)            # (Bt, N, 128)

    # --- GCN layer 1 per graph: H = relu(A_hat @ (X W1) + b1) ------------------
    h = jnp.einsum("bij,bjk->bik", adj, xw,
                   preferred_element_type=jnp.float32)            # (Bt, N, 128) f32
    h = jnp.maximum(h + b1, 0.0)

    # --- mu layer + mean pool, folded: pooled = (mean_rows A_hat) @ H ----------
    # (VPU broadcast-mul + sublane reduce; Wmu is folded into the next layer.)
    pooled = jnp.sum(a_pool[:, :, None] * h, axis=1)              # (Bt, 128) f32

    # --- classifier layer 1 with host-folded W_fold = Wmu @ Wc1 ----------------
    c1 = jnp.dot(pooled.astype(jnp.bfloat16), w_fold,
                 preferred_element_type=jnp.float32)              # (Bt, 128) f32
    c1 = jnp.maximum(c1 + b_fold, 0.0)                            # padded lanes = 0

    # --- final Linear(64,1): VPU mul + cross-lane reduce, then sigmoid ---------
    logit = jnp.sum(c1 * wc2_row, axis=-1, keepdims=True) + bc2_row   # (Bt, 128)
    out_ref[...] = jax.nn.sigmoid(logit)                          # every lane = prob


# ----------------------------------------------------------------------------
# Host-side packing of parameters into 2 lane-dense slabs (with Wmu@Wc1 fold).
# ----------------------------------------------------------------------------
def _pad2(w, rows, cols=LANES):
    r, c = w.shape
    return jnp.pad(w, ((0, rows - r), (0, cols - c)))


def pack_params(p, f_pad):
    # Fold the mu projection into the first classifier Linear (no nonlinearity
    # between them): c1 = relu(pooled @ (Wmu@Wc1) + (bmu@Wc1 + bc1)).
    w_fold = p["wmu"].astype(jnp.float32) @ p["wc1"].astype(jnp.float32)        # (H, 64)
    b_fold = p["bmu"].astype(jnp.float32) @ p["wc1"].astype(jnp.float32) + p["bc1"]

    w_slab = jnp.concatenate(
        [_pad2(p["w1"].astype(jnp.float32), f_pad),   # rows [0, F_pad)
         _pad2(w_fold, LANES)],                       # rows [F_pad, F_pad+128)
        axis=0,
    ).astype(jnp.bfloat16)

    b_slab = jnp.concatenate(
        [
            _pad2(p["b1"].astype(jnp.float32), 1),            # row 0: b1
            _pad2(b_fold, 1),                                  # row 1: folded bias
            _pad2(p["wc2"].astype(jnp.float32).T, 1),          # row 2: wc2 as a row
            jnp.broadcast_to(p["bc2"].astype(jnp.float32).reshape(1, 1), (1, LANES)),
            jnp.zeros((4, LANES), jnp.float32),
        ],
        axis=0,
    )  # (8, 128) f32
    return w_slab, b_slab


# ----------------------------------------------------------------------------
# Wrapper: batched forward, Bt graphs per grid step, weights resident in VMEM.
# ----------------------------------------------------------------------------
def discriminator_vgae_forward(adj, x, params, *, bt=8):
    """adj: (B, N, N), x: (B, N, F)  ->  (B, 1) confidences."""
    B, N, F = x.shape
    H = params["w1"].shape[1]
    L = params["wmu"].shape[1]
    assert H <= LANES and L <= LANES and params["wc1"].shape[1] <= LANES
    assert B % bt == 0 and bt % 8 == 0, "pick Bt a multiple of 8 dividing B"

    f_pad = -(-F // 8) * 8

    # Host-side preprocessing: bf16 storage, flattened node rows, pooled adj row.
    x_flat = x.reshape(B * N, F)
    if f_pad != F:
        x_flat = jnp.pad(x_flat, ((0, 0), (0, f_pad - F)))
    x_flat = x_flat.astype(jnp.bfloat16)
    adj_bf = adj.astype(jnp.bfloat16)
    a_pool = jnp.mean(adj, axis=1).astype(jnp.float32)            # (B, N)

    w_slab, b_slab = pack_params(params, f_pad)
    w_rows = f_pad + LANES

    out = pl.pallas_call(
        _disc_kernel,
        out_shape=jax.ShapeDtypeStruct((B, LANES), jnp.float32),
        grid=(B // bt,),
        in_specs=[
            # per-step blocks of Bt graphs (vary with grid index)
            pl.BlockSpec((bt, N, N), lambda b: (b, 0, 0)),
            pl.BlockSpec((bt * N, f_pad), lambda b: (b, 0)),
            pl.BlockSpec((bt, N), lambda b: (b, 0)),
            # packed parameters: constant block index -> stay resident in VMEM
            pl.BlockSpec((w_rows, LANES), lambda b: (0, 0)),
            pl.BlockSpec((8, LANES), lambda b: (0, 0)),
        ],
        out_specs=pl.BlockSpec((bt, LANES), lambda b: (b, 0)),
        compiler_params=pltpu.CompilerParams(dimension_semantics=("parallel",)),
    )(adj_bf, x_flat, a_pool, w_slab, b_slab)

    return out[:, :1]  # (B, 1), lane 0 holds the confidence


# ----------------------------------------------------------------------------
# Plain-JAX glue: normalized adjacency, parameter init, f32 reference forward.
# ----------------------------------------------------------------------------
def build_normalized_adjacency(edge_index, edge_weight, num_nodes):
    """A_hat = D^-1/2 (A + I) D^-1/2, matching GCNConv's symmetric norm."""
    src, dst = edge_index[0], edge_index[1]
    a = jnp.zeros((num_nodes, num_nodes), jnp.float32)
    a = a.at[dst, src].add(edge_weight)
    a = a + jnp.eye(num_nodes, dtype=jnp.float32)
    deg = jnp.sum(a, axis=1)
    d_inv_sqrt = jnp.where(deg > 0, 1.0 / jnp.sqrt(deg), 0.0)
    return a * d_inv_sqrt[:, None] * d_inv_sqrt[None, :]


def init_params(key, in_feats, hidden, latent):
    ks = jax.random.split(key, 8)
    s = 0.1
    return {
        "w1": s * jax.random.normal(ks[0], (in_feats, hidden), jnp.float32),
        "b1": jnp.zeros((1, hidden), jnp.float32),
        "wmu": s * jax.random.normal(ks[1], (hidden, latent), jnp.float32),
        "bmu": jnp.zeros((1, latent), jnp.float32),
        "wc1": s * jax.random.normal(ks[2], (latent, 64), jnp.float32),
        "bc1": s * jax.random.normal(ks[3], (1, 64), jnp.float32),
        "wc2": s * jax.random.normal(ks[4], (64, 1), jnp.float32),
        "bc2": s * jax.random.normal(ks[5], (1, 1), jnp.float32),
    }


def reference_forward(adj, x, p):
    """Pure-JAX f32 single-graph reference (unfolded mean-pool, unfused MLP)."""
    h = jnp.maximum(adj @ (x @ p["w1"]) + p["b1"], 0.0)
    z_nodes = adj @ (h @ p["wmu"]) + p["bmu"]
    z = jnp.mean(z_nodes, axis=0, keepdims=True)
    c1 = jnp.maximum(z @ p["wc1"] + p["bc1"], 0.0)
    return jax.nn.sigmoid(c1 @ p["wc2"] + p["bc2"])  # (1, 1)


if __name__ == "__main__":
    key = jax.random.PRNGKey(0)
    k_x, k_w, k_e = jax.random.split(key, 3)

    batch, num_nodes, in_feats, hidden, latent = 16, 8, 16, 64, 32

    # Node features for each graph in the batch.
    x = jax.random.normal(k_x, (batch, num_nodes, in_feats), jnp.float32)

    # Ring graphs (both directions) with per-graph random positive edge weights.
    src = jnp.arange(num_nodes, dtype=jnp.int32)
    dst = (src + 1) % num_nodes
    edge_index = jnp.stack(
        [jnp.concatenate([src, dst]), jnp.concatenate([dst, src])], axis=0
    )
    edge_weight = (
        jnp.abs(jax.random.normal(k_e, (batch, edge_index.shape[1]), jnp.float32)) + 0.5
    )
    adj = jax.vmap(
        lambda w: build_normalized_adjacency(edge_index, w, num_nodes)
    )(edge_weight)

    params = init_params(k_w, in_feats, hidden, latent)

    out = discriminator_vgae_forward(adj, x, params, bt=8)
    out = jax.block_until_ready(out)

    ref = jax.vmap(lambda a, xx: reference_forward(a, xx, params))(adj, x)
    ref = ref.reshape(batch, 1)

    assert out.shape == (batch, 1)
    # bf16 storage / MXU inputs with f32 accumulation -> tolerance sized for bf16.
    assert jnp.allclose(out, ref, atol=2e-2, rtol=2e-2), (out, ref)

    print("KERNEL_OK")
</pallas_src>

<mosaic_0001>
module attributes {stable_mosaic.version = 11 : i64} {
  func.func @_disc_kernel(%arg0: i32, %arg1: memref<8x8x8xbf16, #tpu.memory_space<vmem>>, %arg2: memref<64x16xbf16, #tpu.memory_space<vmem>>, %arg3: memref<8x8xf32, #tpu.memory_space<vmem>>, %arg4: memref<144x128xbf16, #tpu.memory_space<vmem>>, %arg5: memref<8x128xf32, #tpu.memory_space<vmem>>, %arg6: memref<8x128xf32, #tpu.memory_space<vmem>>) attributes {dimension_semantics = [#tpu.dimension_semantics<parallel>], iteration_bounds = array<i64: 2>, scalar_prefetch = 0 : i64, scratch_operands = 0 : i64, tpu.core_type = #tpu.core_type<tc>, window_params = [{transform_indices = @transform_0, window_bounds = array<i64: 8, 8, 8>}, {transform_indices = @transform_1, window_bounds = array<i64: 64, 16>}, {transform_indices = @transform_2, window_bounds = array<i64: 8, 8>}, {pipeline_mode = #tpu.pipeline_mode<synchronous>, transform_indices = @transform_3, window_bounds = array<i64: 144, 128>}, {pipeline_mode = #tpu.pipeline_mode<synchronous>, transform_indices = @transform_4, window_bounds = array<i64: 8, 128>}, {transform_indices = @transform_5, window_bounds = array<i64: 8, 128>}]} {
    %c0 = arith.constant 0 : index
    %c0_0 = arith.constant 0 : index
    %c0_1 = arith.constant 0 : index
    %0 = vector.load %arg1[%c0, %c0_0, %c0_1] : memref<8x8x8xbf16, #tpu.memory_space<vmem>>, vector<8x8x8xbf16>
    %c0_2 = arith.constant 0 : index
    %c0_3 = arith.constant 0 : index
    %1 = vector.load %arg2[%c0_2, %c0_3] : memref<64x16xbf16, #tpu.memory_space<vmem>>, vector<64x16xbf16>
    %c0_4 = arith.constant 0 : index
    %c0_5 = arith.constant 0 : index
    %2 = vector.load %arg3[%c0_4, %c0_5] : memref<8x8xf32, #tpu.memory_space<vmem>>, vector<8x8xf32>
    %c0_6 = arith.constant 0 : index
    %c0_7 = arith.constant 0 : index
    %3 = vector.load %arg4[%c0_6, %c0_7] : memref<144x128xbf16, #tpu.memory_space<vmem>>, vector<16x128xbf16>
    %c16 = arith.constant 16 : index
    %c0_8 = arith.constant 0 : index
    %4 = vector.load %arg4[%c16, %c0_8] : memref<144x128xbf16, #tpu.memory_space<vmem>>, vector<128x128xbf16>
    %c0_9 = arith.constant 0 : index
    %c0_10 = arith.constant 0 : index
    %5 = vector.load %arg5[%c0_9, %c0_10] : memref<8x128xf32, #tpu.memory_space<vmem>>, vector<1x128xf32>
    %c1 = arith.constant 1 : index
    %c0_11 = arith.constant 0 : index
    %6 = vector.load %arg5[%c1, %c0_11] : memref<8x128xf32, #tpu.memory_space<vmem>>, vector<1x128xf32>
    %c2 = arith.constant 2 : index
    %c0_12 = arith.constant 0 : index
    %7 = vector.load %arg5[%c2, %c0_12] : memref<8x128xf32, #tpu.memory_space<vmem>>, vector<1x128xf32>
    %c3 = arith.constant 3 : index
    %c0_13 = arith.constant 0 : index
    %8 = vector.load %arg5[%c3, %c0_13] : memref<8x128xf32, #tpu.memory_space<vmem>>, vector<1x128xf32>
    %cst = arith.constant dense<0.000000e+00> : vector<64x128xf32>
    %9 = tpu.matmul %1, %3, %cst {dimension_numbers = #tpu.dot_dimension_numbers<[1], [0], [0], [1], [0, 0, 1, 1], [], []>} : vector<64x16xbf16>, vector<16x128xbf16>, vector<64x128xf32> -> vector<64x128xf32>
    %10 = vector.shape_cast %9 : vector<64x128xf32> to vector<8x8x128xf32>
    %11 = arith.truncf %10 : vector<8x8x128xf32> to vector<8x8x128xbf16>
    "tpu.trace_start"() <{level = 10 : i32, message = "bij,bjk->bik"}> : () -> ()
    %cst_14 = arith.constant dense<0.000000e+00> : vector<8x8x128xf32>
    %12 = tpu.matmul %0, %11, %cst_14 {dimension_numbers = #tpu.dot_dimension_numbers<[2], [1], [1], [2], [0, 0, 0, 1, 1, 2], [0], [0]>} : vector<8x8x8xbf16>, vector<8x8x128xbf16>, vector<8x8x128xf32> -> vector<8x8x128xf32>
    "tpu.trace_stop"() : () -> ()
    %13 = vector.shape_cast %5 : vector<1x128xf32> to vector<1x1x128xf32>
    %14 = vector.broadcast %13 : vector<1x1x128xf32> to vector<8x8x128xf32>
    %15 = arith.addf %12, %14 : vector<8x8x128xf32>
    %cst_15 = arith.constant 0.000000e+00 : f32
    %16 = vector.broadcast %cst_15 : f32 to vector<8x8x128xf32>
    %17 = arith.maximumf %15, %16 : vector<8x8x128xf32>
    %18 = vector.shape_cast %2 : vector<8x8xf32> to vector<8x8x1xf32>
    %19 = vector.broadcast %18 : vector<8x8x1xf32> to vector<8x8x128xf32>
    %20 = arith.mulf %19, %17 : vector<8x8x128xf32>
    %cst_16 = arith.constant dense<0.000000e+00> : vector<8x128xf32>
    %21 = vector.multi_reduction <add>, %20, %cst_16 [1] : vector<8x8x128xf32> to vector<8x128xf32>
    %22 = arith.truncf %21 : vector<8x128xf32> to vector<8x128xbf16>
    %cst_17 = arith.constant dense<0.000000e+00> : vector<8x128xf32>
    %23 = tpu.matmul %22, %4, %cst_17 {dimension_numbers = #tpu.dot_dimension_numbers<[1], [0], [0], [1], [0, 0, 1, 1], [], []>} : vector<8x128xbf16>, vector<128x128xbf16>, vector<8x128xf32> -> vector<8x128xf32>
    %24 = vector.broadcast %6 : vector<1x128xf32> to vector<8x128xf32>
    %25 = arith.addf %23, %24 : vector<8x128xf32>
    %cst_18 = arith.constant 0.000000e+00 : f32
    %26 = vector.broadcast %cst_18 : f32 to vector<8x128xf32>
    %27 = arith.maximumf %25, %26 : vector<8x128xf32>
    %28 = vector.broadcast %7 : vector<1x128xf32> to vector<8x128xf32>
    %29 = arith.mulf %27, %28 : vector<8x128xf32>
    %cst_19 = arith.constant dense<0.000000e+00> : vector<8xf32>
    %30 = vector.multi_reduction <add>, %29, %cst_19 [1] : vector<8x128xf32> to vector<8xf32>
    %31 = vector.shape_cast %30 : vector<8xf32> to vector<8x1xf32>
    %32 = vector.broadcast %31 : vector<8x1xf32> to vector<8x128xf32>
    %33 = vector.broadcast %8 : vector<1x128xf32> to vector<8x128xf32>
    %34 = arith.addf %32, %33 : vector<8x128xf32>
    %35 = arith.negf %34 : vector<8x128xf32>
    %36 = math.exp %35 : vector<8x128xf32>
    %cst_20 = arith.constant 1.000000e+00 : f32
    %37 = vector.broadcast %cst_20 : f32 to vector<8x128xf32>
    %38 = arith.addf %37, %36 : vector<8x128xf32>
    %39 = arith.divf %37, %38 : vector<8x128xf32>
    %c0_21 = arith.constant 0 : index
    %c0_22 = arith.constant 0 : index
    %40 = vector.load %arg6[%c0_21, %c0_22] : memref<8x128xf32, #tpu.memory_space<vmem>>, vector<8x128xf32>
    tpu.vector_store %arg6[%c0_21, %c0_22], %39 {strides = array<i32>} : memref<8x128xf32, #tpu.memory_space<vmem>>, vector<8x128xf32>,
    return
  }
  func.func @transform_0(%arg0: i32) -> (i32, i32, i32) {
    %c0_i32 = arith.constant 0 : i32
    %c0_i32_0 = arith.constant 0 : i32
    %c0_i32_1 = arith.constant 0 : i32
    return %arg0, %c0_i32, %c0_i32_0 : i32, i32, i32
  }
  func.func @transform_1(%arg0: i32) -> (i32, i32) {
    %c0_i32 = arith.constant 0 : i32
    %c0_i32_0 = arith.constant 0 : i32
    return %arg0, %c0_i32 : i32, i32
  }
  func.func @transform_2(%arg0: i32) -> (i32, i32) {
    %c0_i32 = arith.constant 0 : i32
    %c0_i32_0 = arith.constant 0 : i32
    return %arg0, %c0_i32 : i32, i32
  }
  func.func @transform_3(%arg0: i32) -> (i32, i32) {
    %c0_i32 = arith.constant 0 : i32
    %c0_i32_0 = arith.constant 0 : i32
    %c0_i32_1 = arith.constant 0 : i32
    return %c0_i32, %c0_i32_0 : i32, i32
  }
  func.func @transform_4(%arg0: i32) -> (i32, i32) {
    %c0_i32 = arith.constant 0 : i32
    %c0_i32_0 = arith.constant 0 : i32
    %c0_i32_1 = arith.constant 0 : i32
    return %c0_i32, %c0_i32_0 : i32, i32
  }
  func.func @transform_5(%arg0: i32) -> (i32, i32) {
    %c0_i32 = arith.constant 0 : i32
    %c0_i32_0 = arith.constant 0 : i32
    return %arg0, %c0_i32 : i32, i32
  }
}

</mosaic_0001>

<llo_original>
// kernel: tpu_custom_call.1
$region0: #{tpu_custom_call.1}
  #allocation0 [shape = 'u32[]', space=smem, size = 0x4, offset = 0x4, fixed_abs, tag = 'smem constant byte address 0x4 - core index']
  #allocation1 [shape = 'u32[144,128]{1,0:T(1,128)}', space=vmem, size = 0x12000, scoped, tag = 'internal scratch']
  %s0 = inlined_call_operand.vmem [shape: bf16[16,8,8], index: 0, kind: input, shape index: {}]
  %s1 = inlined_call_operand.vmem [shape: bf16[128,16], index: 1, kind: input, shape index: {}]
  %s2 = inlined_call_operand.vmem [shape: f32[16,8], index: 2, kind: input, shape index: {}]
  %s3 = inlined_call_operand.vmem [shape: bf16[144,128], index: 3, kind: input, shape index: {}]
  %s4 = inlined_call_operand.vmem [shape: f32[8,128], index: 4, kind: input, shape index: {}]
  %s5 = inlined_call_operand.hbm [shape: f32[16,128], index: 5, kind: output, shape index: {}]
  %s6 = sld [smem:[#allocation0]]
  $region53: #{tpu_custom_call.1} parent=0
    _
  %s8 = ssub.s32 1, %s6
  %s9 = scalar_select 0, %s8, %s6
  $region1: #{tpu_custom_call.1} parent=0
    #allocation2 [shape = 'u8[8192]{0}', space=vmem, size = 0x2000, scoped, tag = 'output window, operand 0']
    #allocation3 [shape = 's32[2]{0}', space=sflag, size = 0x8, scoped, tag = 'scoped memory for tpu_custom_call.1']
    %10 = vsyncpa [#allocation3], 0
    %s11 = scalar_lea.sflag [#allocation3], 1
    %12 = vsyncpa %s11, 0
    loop: start=0, step=1, limit=4
    $region2: #{tpu_custom_call.1} parent=1 // loop_pre_header
      _
    $region3: #{tpu_custom_call.1} parent=1 // loop_header
      %s14 = sphi 0, %s18
      %p15 = scmp.ge.s32.totalorder %s14, 4
      %s24 = sphi 0, %s26
      %s27 = sphi 0, %s24
      %s28 = sphi 0, %s27
      %s44 = sphi 0, %s28
      %s50 = sphi 0, %s52
      %s53 = sphi 0, %s50
      %s54 = sphi 0, %s53
      %s70 = sphi 0, %s54
      %s76 = sphi 0, %s78
      %s79 = sphi 0, %s76
      %s80 = sphi 0, %s79
      %s96 = sphi 0, %s80
      %s100 = sphi 0, %s100
      %s102 = sphi 0, %s100
      %s103 = sphi 0, %s102
      %s117 = sphi 0, %s103
      %s121 = sphi 0, %s121
      %s123 = sphi 0, %s121
      %s124 = sphi 0, %s123
      %s138 = sphi 0, %s124
      %s144 = sphi 0, %s146
      %s147 = sphi 0, %s144
      %s148 = sphi 0, %s147
      %s164 = sphi 0, %s148
    $region4: #{tpu_custom_call.1} parent=1 // loop_header_branch
      %17 = sbr.rel (%p15) target = $region8
    $region5: #{tpu_custom_call.1} parent=1 // loop_body
      %s19 = ssub.s32 %s14, 1
      %s20 = ssub.s32 %s14, 2
      %s21 = sadd.s32 %s14, 1
      %s22 = ssub.s32 %s14, %s21
      %p23 = scmp.eq.s32.totalorder %s22, 0
      %s25 = sadd.s32 %s24, 1
      %s26 = scalar_select %p23, %s24, %s25
      %p29 = pneg %p23
      %p30 = scmp.eq.s32.totalorder %s14, 1
      %p31 = por %p29, %p30
      %p32 = scmp.ne.s32.totalorder %s24, %s27
      %p33 = scmp.eq.s32.totalorder %s14, 0
      %p34 = por %p32, %p33
      %p35 = scmp.ne.s32.totalorder %s24, %s27
      %p36 = scmp.eq.s32.totalorder %s19, 1
      %p37 = por %p35, %p36
      %p38 = scmp.ne.s32.totalorder %s27, %s28
      %p39 = scmp.eq.s32.totalorder %s19, 0
      %p40 = por %p38, %p39
      %p41 = scmp.ne.s32.totalorder %s27, %s28
      %p42 = scmp.eq.s32.totalorder %s20, 1
      %p43 = por %p41, %p42
      %p45 = scmp.ne.s32.totalorder %s28, %s44
      %p46 = scmp.eq.s32.totalorder %s20, 0
      %p47 = por %p45, %p46
      %s48 = ssub.s32 %s14, %s21
      %p49 = scmp.eq.s32.totalorder %s48, 0
      %s51 = sadd.s32 %s50, 1
      %s52 = scalar_select %p49, %s50, %s51
      %p55 = pneg %p49
      %p56 = scmp.eq.s32.totalorder %s14, 1
      %p57 = por %p55, %p56
      %p58 = scmp.ne.s32.totalorder %s50, %s53
      %p59 = scmp.eq.s32.totalorder %s14, 0
      %p60 = por %p58, %p59
      %p61 = scmp.ne.s32.totalorder %s50, %s53
      %p62 = scmp.eq.s32.totalorder %s19, 1
      %p63 = por %p61, %p62
      %p64 = scmp.ne.s32.totalorder %s53, %s54
      %p65 = scmp.eq.s32.totalorder %s19, 0
      %p66 = por %p64, %p65
      %p67 = scmp.ne.s32.totalorder %s53, %s54
      %p68 = scmp.eq.s32.totalorder %s20, 1
      %p69 = por %p67, %p68
      %p71 = scmp.ne.s32.totalorder %s54, %s70
      %p72 = scmp.eq.s32.totalorder %s20, 0
      %p73 = por %p71, %p72
      %s74 = ssub.s32 %s14, %s21
      %p75 = scmp.eq.s32.totalorder %s74, 0
      %s77 = sadd.s32 %s76, 1
      %s78 = scalar_select %p75, %s76, %s77
      %p81 = pneg %p75
      %p82 = scmp.eq.s32.totalorder %s14, 1
      %p83 = por %p81, %p82
      %p84 = scmp.ne.s32.totalorder %s76, %s79
      %p85 = scmp.eq.s32.totalorder %s14, 0
      %p86 = por %p84, %p85
      %p87 = scmp.ne.s32.totalorder %s76, %s79
      %p88 = scmp.eq.s32.totalorder %s19, 1
      %p89 = por %p87, %p88
      %p90 = scmp.ne.s32.totalorder %s79, %s80
      %p91 = scmp.eq.s32.totalorder %s19, 0
      %p92 = por %p90, %p91
      %p93 = scmp.ne.s32.totalorder %s79, %s80
      %p94 = scmp.eq.s32.totalorder %s20, 1
      %p95 = por %p93, %p94
      %p97 = scmp.ne.s32.totalorder %s80, %s96
      %p98 = scmp.eq.s32.totalorder %s20, 0
      %p99 = por %p97, %p98
      %s101 = sadd.s32 %s100, 1
      %p104 = scmp.eq.s32.totalorder %s14, 1
      %p105 = scmp.ne.s32.totalorder %s100, %s102
      %p106 = scmp.eq.s32.totalorder %s14, 0
      %p107 = por %p105, %p106
      %p108 = scmp.ne.s32.totalorder %s100, %s102
      %p109 = scmp.eq.s32.totalorder %s19, 1
      %p110 = por %p108, %p109
      %p111 = scmp.ne.s32.totalorder %s102, %s103
      %p112 = scmp.eq.s32.totalorder %s19, 0
      %p113 = por %p111, %p112
      %p114 = scmp.ne.s32.totalorder %s102, %s103
      %p115 = scmp.eq.s32.totalorder %s20, 1
      %p116 = por %p114, %p115
      %p118 = scmp.ne.s32.totalorder %s103, %s117
      %p119 = scmp.eq.s32.totalorder %s20, 0
      %p120 = por %p118, %p119
      %s122 = sadd.s32 %s121, 1
      %p125 = scmp.eq.s32.totalorder %s14, 1
      %p126 = scmp.ne.s32.totalorder %s121, %s123
      %p127 = scmp.eq.s32.totalorder %s14, 0
      %p128 = por %p126, %p127
      %p129 = scmp.ne.s32.totalorder %s121, %s123
      %p130 = scmp.eq.s32.totalorder %s19, 1
      %p131 = por %p129, %p130
      %p132 = scmp.ne.s32.totalorder %s123, %s124
      %p133 = scmp.eq.s32.totalorder %s19, 0
      %p134 = por %p132, %p133
      %p135 = scmp.ne.s32.totalorder %s123, %s124
      %p136 = scmp.eq.s32.totalorder %s20, 1
      %p137 = por %p135, %p136
      %p139 = scmp.ne.s32.totalorder %s124, %s138
      %p140 = scmp.eq.s32.totalorder %s20, 0
      %p141 = por %p139, %p140
      %s142 = ssub.s32 %s14, %s21
      %p143 = scmp.eq.s32.totalorder %s142, 0
      %s145 = sadd.s32 %s144, 1
      %s146 = scalar_select %p143, %s144, %s145
      %p149 = pneg %p143
      %p150 = scmp.eq.s32.totalorder %s14, 1
      %p151 = por %p149, %p150
      %p152 = scmp.ne.s32.totalorder %s144, %s147
      %p153 = scmp.eq.s32.totalorder %s14, 0
      %p154 = por %p152, %p153
      %p155 = scmp.ne.s32.totalorder %s144, %s147
      %p156 = scmp.eq.s32.totalorder %s19, 1
      %p157 = por %p155, %p156
      %p158 = scmp.ne.s32.totalorder %s147, %s148
      %p159 = scmp.eq.s32.totalorder %s19, 0
      %p160 = por %p158, %p159
      %p161 = scmp.ne.s32.totalorder %s147, %s148
      %p162 = scmp.eq.s32.totalorder %s20, 1
      %p163 = por %p161, %p162
      %p165 = scmp.ne.s32.totalorder %s148, %s164
      %p166 = scmp.eq.s32.totalorder %s20, 0
      %p167 = por %p165, %p166
      %p168 = scmp.le.s32.totalorder 1, %s14
      %p169 = scmp.lt.s32.totalorder %s14, 3
      %p170 = pnand %p168, %p169
      %p171 = pneg %p170
      // Predicated region
      $region9: #{tpu_custom_call.1} parent=5 // pred_check
        _
      $region10: #{tpu_custom_call.1} parent=5 // pred_check_branch
        %173 = sbr.rel (%p170) target = $region12
      $region11: #{tpu_custom_call.1} parent=5 // pred_region
        %s174 = ssub.s32 %s14, 1
        // Predicated region
        $region13: #{tpu_custom_call.1} parent=11 // pred_check
          %p175 = pneg %p113
        $region14: #{tpu_custom_call.1} parent=11 // pred_check_branch
          %177 = sbr.rel (%p175) target = $region16
        $region15: #{tpu_custom_call.1} parent=11 // pred_region
          _
        $region16: #{tpu_custom_call.1} parent=11 // pred_fallthru
          _
        // Predicated region
        $region17: #{tpu_custom_call.1} parent=11 // pred_check
          %p178 = pneg %p134
        $region18: #{tpu_custom_call.1} parent=11 // pred_check_branch
          %180 = sbr.rel (%p178) target = $region20
        $region19: #{tpu_custom_call.1} parent=11 // pred_region
          _
        $region20: #{tpu_custom_call.1} parent=11 // pred_fallthru
          _
      $region12: #{tpu_custom_call.1} parent=5 // pred_fallthru
        _
      %p181 = scmp.lt.s32.totalorder %s14, 2
      // Predicated region
      $region21: #{tpu_custom_call.1} parent=5 // pred_check
        %p182 = pneg %p181
      $region22: #{tpu_custom_call.1} parent=5 // pred_check_branch
        %184 = sbr.rel (%p182) target = $region24
      $region23: #{tpu_custom_call.1} parent=5 // pred_region
        // Predicated region
        $region25: #{tpu_custom_call.1} parent=23 // pred_check
          %p185 = pneg %p34
        $region26: #{tpu_custom_call.1} parent=23 // pred_check_branch
          %187 = sbr.rel (%p185) target = $region28
        $region27: #{tpu_custom_call.1} parent=23 // pred_region
          %s188 = smul.u32 8, %s14
          %p189 = scmp.lt.s32.totalorder %s188, 15
          %s190 = scalar_select %p189, %s188, 15
          %s191 = smul.addr %s190, 4
          %s192 = scalar_lea.vmem %s0, %s191
          %s193 = smul.u32 8, %s14
        $region28: #{tpu_custom_call.1} parent=23 // pred_fallthru
          _
        // Predicated region
        $region29: #{tpu_custom_call.1} parent=23 // pred_check
          %p194 = pneg %p60
        $region30: #{tpu_custom_call.1} parent=23 // pred_check_branch
          %196 = sbr.rel (%p194) target = $region32
        $region31: #{tpu_custom_call.1} parent=23 // pred_region
          %s197 = smul.u32 8, %s14
          %p198 = scmp.lt.s32.totalorder %s197, 15
          %s199 = scalar_select %p198, %s197, 15
          %s200 = smul.addr %s199, 4
          %s201 = scalar_lea.vmem %s1, %s200
          %s202 = smul.u32 8, %s14
        $region32: #{tpu_custom_call.1} parent=23 // pred_fallthru
          _
        // Predicated region
        $region33: #{tpu_custom_call.1} parent=23 // pred_check
          %p203 = pneg %p86
        $region34: #{tpu_custom_call.1} parent=23 // pred_check_branch
          %205 = sbr.rel (%p203) target = $region36
        $region35: #{tpu_custom_call.1} parent=23 // pred_region
          %p206 = scmp.lt.s32.totalorder %s14, 1
          %s207 = scalar_select %p206, %s14, 1
          %s208 = smul.addr %s207, 8
          %s209 = scalar_lea.vmem %s2, %s208
        $region36: #{tpu_custom_call.1} parent=23 // pred_fallthru
          _
      $region24: #{tpu_custom_call.1} parent=5 // pred_fallthru
        _
      %p210 = scmp.le.s32.totalorder 1, %s14
      %p211 = scmp.lt.s32.totalorder %s14, 3
      %p212 = pnand %p210, %p211
      %p213 = pneg %p212
      // Predicated region
      $region37: #{tpu_custom_call.1} parent=5 // pred_check
        _
      $region38: #{tpu_custom_call.1} parent=5 // pred_check_branch
        %215 = sbr.rel (%p212) target = $region40
      $region39: #{tpu_custom_call.1} parent=5 // pred_region
        %s216 = ssub.s32 %s14, 1
        %s217 = smul.u32 8, %s19
        %p218 = scmp.lt.s32.totalorder %s217, 15
        %s219 = scalar_select %p218, %s217, 15
        %s220 = smul.addr %s219, 4
        %s221 = scalar_lea.vmem %s0, %s220
        %p222 = pneg %p40
        %p223 = pneg %p37
        %s224 = smul.u32 8, %s19
        %p225 = scmp.lt.s32.totalorder %s224, 15
        %s226 = scalar_select %p225, %s224, 15
        %s227 = smul.addr %s226, 4
        %s228 = scalar_lea.vmem %s1, %s227
        %p229 = pneg %p66
        %p230 = pneg %p63
        %p231 = scmp.lt.s32.totalorder %s19, 1
        %s232 = scalar_select %p231, %s19, 1
        %s233 = smul.addr %s232, 8
        %s234 = scalar_lea.vmem %s2, %s233
        %p235 = pneg %p92
        %p236 = pneg %p89
        %p237 = pneg %p113
        %p238 = pneg %p110
        %p239 = pneg %p134
        %p240 = pneg %p131
        %p241 = pneg %p160
        %p242 = pneg %p157
        %s243 = sand.u32 %s147, 1
        %s244 = scalar_lea.sflag [#allocation3], %s243
        %s245 = sand.u32 %s147, 1
        %s246 = smul.addr %s245, 8
        %s247 = scalar_lea.vmem [#allocation2], %s246
        %s248 = smul.u32 8, %s19
        %p249 = scmp.lt.s32.totalorder %s248, 15
        %s250 = scalar_select %p249, %s248, 15
        %s251 = smul.addr %s250, 4
        %s252 = scalar_lea.vmem %s0, %s251
        %s253 = smul.u32 8, %s19
        %s254 = smul.u32 8, %s19
        %p255 = scmp.lt.s32.totalorder %s254, 15
        %s256 = scalar_select %p255, %s254, 15
        %s257 = smul.addr %s256, 4
        %s258 = scalar_lea.vmem %s1, %s257
        %s259 = smul.u32 8, %s19
        %p260 = scmp.lt.s32.totalorder %s19, 1
        %s261 = scalar_select %p260, %s19, 1
        %s262 = smul.addr %s261, 8
        %s263 = scalar_lea.vmem %s2, %s262
        %v265 = vld [vmem:[%s252] sm:$0xf]
        %v266 = vld [vmem:[%s252 + $0x4] sm:$0xf]
        %v267 = vld [vmem:[%s252 + $0x8] sm:$0xf]
        %v268 = vld [vmem:[%s252 + $0xc] sm:$0xf]
        %v269 = vld [vmem:[%s252 + $0x10] sm:$0xf]
        %v270 = vld [vmem:[%s252 + $0x14] sm:$0xf]
        %v271 = vld [vmem:[%s252 + $0x18] sm:$0xf]
        %v272 = vld [vmem:[%s252 + $0x1c] sm:$0xf]
        %v273 = vld [vmem:[%s258] sm:$0xf]
        %v274 = vld [vmem:[%s258 + $0x4] sm:$0xf]
        %v275 = vld [vmem:[%s258 + $0x8] sm:$0xf]
        %v276 = vld [vmem:[%s258 + $0xc] sm:$0xf]
        %v277 = vld [vmem:[%s258 + $0x10] sm:$0xf]
        %v278 = vld [vmem:[%s258 + $0x14] sm:$0xf]
        %v279 = vld [vmem:[%s258 + $0x18] sm:$0xf]
        %v280 = vld [vmem:[%s258 + $0x1c] sm:$0xf]
        %v281 = vld [vmem:[%s263] sm:$0xff]
        %v282 = vld [vmem:[%s3] sm:$0xf]
        %v283 = vld [vmem:[%s3 + $0x4] sm:$0xf]
        %v284 = vld [vmem:[%s3 + $0x8] sm:$0xf]
        %v285 = vld [vmem:[%s3 + $0xc] sm:$0xf]
        %v286 = vld [vmem:[%s3 + $0x10] sm:$0xf]
        %v287 = vld [vmem:[%s3 + $0x14] sm:$0xf]
        %v288 = vld [vmem:[%s3 + $0x18] sm:$0xf]
        %v289 = vld [vmem:[%s3 + $0x1c] sm:$0xf]
        %v290 = vld [vmem:[%s3 + $0x20] sm:$0xf]
        %v291 = vld [vmem:[%s3 + $0x24] sm:$0xf]
        %v292 = vld [vmem:[%s3 + $0x28] sm:$0xf]
        %v293 = vld [vmem:[%s3 + $0x2c] sm:$0xf]
        %v294 = vld [vmem:[%s3 + $0x30] sm:$0xf]
        %v295 = vld [vmem:[%s3 + $0x34] sm:$0xf]
        %v296 = vld [vmem:[%s3 + $0x38] sm:$0xf]
        %v297 = vld [vmem:[%s3 + $0x3c] sm:$0xf]
        %v298 = vld [vmem:[%s3 + $0x40] sm:$0xf]
        %v299 = vld [vmem:[%s3 + $0x44] sm:$0xf]
        %v300 = vld [vmem:[%s4] sm:$0x1]
        %v301 = vld [vmem:[%s4 + $0x1] sm:$0x1]
        %v302 = vld [vmem:[%s4 + $0x2] sm:$0x1]
        %v303 = vld [vmem:[%s4 + $0x3] sm:$0x1]
        %v312 = vunpack.c.l.b16 %v273
        %v313 = vunpack.c.l.b16 %v274
        %v314 = vunpack.c.l.b16 %v275
        %v315 = vunpack.c.l.b16 %v276
        %v316 = vunpack.c.l.b16 %v277
        %v317 = vunpack.c.l.b16 %v278
        %v318 = vunpack.c.l.b16 %v279
        %v319 = vunpack.c.l.b16 %v280
        %v320 = vpack.c.b16 %v313, %v312
        %v321 = vpack.c.b16 %v315, %v314
        %v322 = vpack.c.b16 %v317, %v316
        %v323 = vpack.c.b16 %v319, %v318
        %v326 = vunpack.c.l.b16 %v282
        %v327 = vunpack.c.l.b16 %v283
        %v328 = vpack.c.b16 %v327, %v326
        %vm330 = vcmask 130048
        %v332 = vsel %vm330, %v320, 0
        %v335 = vsel %vm330, %v321, 0
        %v338 = vsel %vm330, %v322, 0
        %v341 = vsel %vm330, %v323, 0
        %343 = vmatprep.subr.bf16.mxu0 0
        %344 = vmatpush1.bf16.msra.mxu0 0
        %345 = vmatprep.subr.bf16.mxu0 0
        %346 = vmatpush1.bf16.msra.mxu0 0
        %347 = vmatprep.subr.bf16.mxu0 0
        %348 = vmatpush1.bf16.msra.mxu0 0
        %349 = vmatprep.subr.bf16.mxu0 0
        %350 = vmatpush1.bf16.msra.mxu0 0
        %351 = vmatprep.subr.bf16.mxu0 0
        %352 = vmatpush1.bf16.msra.mxu0 0
        %353 = vmatprep.subr.bf16.mxu0 0
        %354 = vmatpush1.bf16.msra.mxu0 0
        %355 = vmatprep.subr.bf16.mxu0 0
        %356 = vmatpush1.bf16.msra.mxu0 0
        %357 = vmatprep.subr.bf16.mxu0 0
        %358 = vmatpush1.bf16.msra.mxu0 %v328
        %359 = vmatprep.subr.bf16.mxu0 0
        %360 = vmatpush2.bf16.msra.mxu0 0
        %361 = vmatprep.subr.bf16.mxu0 0
        %362 = vmatpush2.bf16.msra.mxu0 0
        %363 = vmatprep.subr.bf16.mxu0 0
        %364 = vmatpush2.bf16.msra.mxu0 0
        %365 = vmatprep.subr.bf16.mxu0 0
        %366 = vmatpush2.bf16.msra.mxu0 0
        %367 = vmatprep.subr.bf16.mxu0 0
        %368 = vmatpush2.bf16.msra.mxu0 0
        %369 = vmatprep.subr.bf16.mxu0 0
        %370 = vmatpush2.bf16.msra.mxu0 0
        %371 = vmatprep.subr.bf16.mxu0 0
        %372 = vmatpush2.bf16.msra.mxu0 0
        %373 = vmatprep.subr.bf16.mxu0 0
        %374 = vmatpush2.bf16.msra.mxu0 0
        %375 = vmatprep.mubr.bf16.mxu0 0
        %376 = vmatmul.mubr.bf16.gmra.mxu0 %v332
        %v377 = vpop.f32.mrf.mxu0
        %v378 = vadd.f32 0.0, %v377
        %v379 = vpop.f32.mrf.mxu0
        %v380 = vpop.f32.mrf.mxu0
        %v381 = vadd.f32 0.0, %v380
        %v382 = vpop.f32.mrf.mxu0
        %383 = vmatprep.mubr.bf16.mxu0 0
        %384 = vmatmul.mubr.bf16.gmra.mxu0 %v335
        %v385 = vpop.f32.mrf.mxu0
        %v386 = vadd.f32 0.0, %v385
        %v387 = vpop.f32.mrf.mxu0
        %v388 = vpop.f32.mrf.mxu0
        %v389 = vadd.f32 0.0, %v388
        %v390 = vpop.f32.mrf.mxu0
        %391 = vmatprep.mubr.bf16.mxu0 0
        %392 = vmatmul.mubr.bf16.gmra.mxu0 %v338
        %v393 = vpop.f32.mrf.mxu0
        %v394 = vadd.f32 0.0, %v393
        %v395 = vpop.f32.mrf.mxu0
        %v396 = vpop.f32.mrf.mxu0
        %v397 = vadd.f32 0.0, %v396
        %v398 = vpop.f32.mrf.mxu0
        %399 = vmatprep.mubr.bf16.mxu0 0
        %400 = vmatmul.mubr.bf16.gmra.mxu0 %v341
        %v401 = vpop.f32.mrf.mxu0
        %v402 = vadd.f32 0.0, %v401
        %v403 = vpop.f32.mrf.mxu0
        %v404 = vpop.f32.mrf.mxu0
        %v405 = vadd.f32 0.0, %v404
        %v406 = vpop.f32.mrf.mxu0
        %407 = vdwg.mxu0
        %v408 = vpack.c.bf16 %v378, %v378
        %v409 = vpack.c.bf16 %v381, %v381
        %v410 = vpack.c.bf16 %v386, %v386
        %v411 = vpack.c.bf16 %v389, %v389
        %v412 = vpack.c.bf16 %v394, %v394
        %v413 = vpack.c.bf16 %v397, %v397
        %v414 = vpack.c.bf16 %v402, %v402
        %v415 = vpack.c.bf16 %v405, %v405
        %v416 = vlaneseq
        %v417 = vshrl.u32 %v416, 7
        %v418 = vsub.s32 0, %v417
        %v419 = vrot.slane %v300, %v418
        %vm420 = vcmask 64512
        %v422 = vsel %vm420, %v265, 0
        %vm424 = vcmask 1043456
        %v426 = vsel %vm424, %v408, 0
        %428 = vmatprep.subr.bf16.mxu0 0
        %429 = vmatpush1.bf16.msra.mxu0 0
        %430 = vmatprep.subr.bf16.mxu0 0
        %431 = vmatpush1.bf16.msra.mxu0 0
        %432 = vmatprep.subr.bf16.mxu0 0
        %433 = vmatpush1.bf16.msra.mxu0 0
        %434 = vmatprep.subr.bf16.mxu0 0
        %435 = vmatpush1.bf16.msra.mxu0 0
        %436 = vmatprep.subr.bf16.mxu0 0
        %437 = vmatpush1.bf16.msra.mxu0 0
        %438 = vmatprep.subr.bf16.mxu0 0
        %439 = vmatpush1.bf16.msra.mxu0 0
        %440 = vmatprep.subr.bf16.mxu0 0
        %441 = vmatpush1.bf16.msra.mxu0 0
        %442 = vmatprep.subr.bf16.mxu0 0
        %443 = vmatpush1.bf16.msra.mxu0 %v426
        %444 = vmatprep.subr.bf16.mxu0 0
        %445 = vmatpush2.bf16.msra.mxu0 0
        %446 = vmatprep.subr.bf16.mxu0 0
        %447 = vmatpush2.bf16.msra.mxu0 0
        %448 = vmatprep.subr.bf16.mxu0 0
        %449 = vmatpush2.bf16.msra.mxu0 0
        %450 = vmatprep.subr.bf16.mxu0 0
        %451 = vmatpush2.bf16.msra.mxu0 0
        %452 = vmatprep.subr.bf16.mxu0 0
        %453 = vmatpush2.bf16.msra.mxu0 0
        %454 = vmatprep.subr.bf16.mxu0 0
        %455 = vmatpush2.bf16.msra.mxu0 0
        %456 = vmatprep.subr.bf16.mxu0 0
        %457 = vmatpush2.bf16.msra.mxu0 0
        %458 = vmatprep.subr.bf16.mxu0 0
        %459 = vmatpush2.bf16.msra.mxu0 0
        %460 = vmatprep.mubr.bf16.mxu0 0
        %461 = vmatmul.mubr.bf16.gmra.mxu0 %v422
        %v462 = vpop.f32.mrf.mxu0
        %v463 = vadd.f32 %v419, %v462
        %v464 = vpop.f32.mrf.mxu0
        %v465 = vpop.f32.mrf.mxu0
        %v466 = vpop.f32.mrf.mxu0
        %467 = vdwg.mxu0
        %v469 = vsel %vm420, %v266, 0
        %v472 = vsel %vm424, %v409, 0
        %474 = vmatprep.subr.bf16.mxu0 0
        %475 = vmatpush1.bf16.msra.mxu0 0
        %476 = vmatprep.subr.bf16.mxu0 0
        %477 = vmatpush1.bf16.msra.mxu0 0
        %478 = vmatprep.subr.bf16.mxu0 0
        %479 = vmatpush1.bf16.msra.mxu0 0
        %480 = vmatprep.subr.bf16.mxu0 0
        %481 = vmatpush1.bf16.msra.mxu0 0
        %482 = vmatprep.subr.bf16.mxu0 0
        %483 = vmatpush1.bf16.msra.mxu0 0
        %484 = vmatprep.subr.bf16.mxu0 0
        %485 = vmatpush1.bf16.msra.mxu0 0
        %486 = vmatprep.subr.bf16.mxu0 0
        %487 = vmatpush1.bf16.msra.mxu0 0
        %488 = vmatprep.subr.bf16.mxu0 0
        %489 = vmatpush1.bf16.msra.mxu0 %v472
        %490 = vmatprep.subr.bf16.mxu0 0
        %491 = vmatpush2.bf16.msra.mxu0 0
        %492 = vmatprep.subr.bf16.mxu0 0
        %493 = vmatpush2.bf16.msra.mxu0 0
        %494 = vmatprep.subr.bf16.mxu0 0
        %495 = vmatpush2.bf16.msra.mxu0 0
        %496 = vmatprep.subr.bf16.mxu0 0
        %497 = vmatpush2.bf16.msra.mxu0 0
        %498 = vmatprep.subr.bf16.mxu0 0
        %499 = vmatpush2.bf16.msra.mxu0 0
        %500 = vmatprep.subr.bf16.mxu0 0
        %501 = vmatpush2.bf16.msra.mxu0 0
        %502 = vmatprep.subr.bf16.mxu0 0
        %503 = vmatpush2.bf16.msra.mxu0 0
        %504 = vmatprep.subr.bf16.mxu0 0
        %505 = vmatpush2.bf16.msra.mxu0 0
        %506 = vmatprep.mubr.bf16.mxu0 0
        %507 = vmatmul.mubr.bf16.gmra.mxu0 %v469
        %v508 = vpop.f32.mrf.mxu0
        %v509 = vadd.f32 %v419, %v508
        %v510 = vpop.f32.mrf.mxu0
        %v511 = vpop.f32.mrf.mxu0
        %v512 = vpop.f32.mrf.mxu0
        %513 = vdwg.mxu0
        %v515 = vsel %vm420, %v267, 0
        %v518 = vsel %vm424, %v410, 0
        %520 = vmatprep.subr.bf16.mxu0 0
        %521 = vmatpush1.bf16.msra.mxu0 0
        %522 = vmatprep.subr.bf16.mxu0 0
        %523 = vmatpush1.bf16.msra.mxu0 0
        %524 = vmatprep.subr.bf16.mxu0 0
        %525 = vmatpush1.bf16.msra.mxu0 0
        %526 = vmatprep.subr.bf16.mxu0 0
        %527 = vmatpush1.bf16.msra.mxu0 0
        %528 = vmatprep.subr.bf16.mxu0 0
        %529 = vmatpush1.bf16.msra.mxu0 0
        %530 = vmatprep.subr.bf16.mxu0 0
        %531 = vmatpush1.bf16.msra.mxu0 0
        %532 = vmatprep.subr.bf16.mxu0 0
        %533 = vmatpush1.bf16.msra.mxu0 0
        %534 = vmatprep.subr.bf16.mxu0 0
        %535 = vmatpush1.bf16.msra.mxu0 %v518
        %536 = vmatprep.subr.bf16.mxu0 0
        %537 = vmatpush2.bf16.msra.mxu0 0
        %538 = vmatprep.subr.bf16.mxu0 0
        %539 = vmatpush2.bf16.msra.mxu0 0
        %540 = vmatprep.subr.bf16.mxu0 0
        %541 = vmatpush2.bf16.msra.mxu0 0
        %542 = vmatprep.subr.bf16.mxu0 0
        %543 = vmatpush2.bf16.msra.mxu0 0
        %544 = vmatprep.subr.bf16.mxu0 0
        %545 = vmatpush2.bf16.msra.mxu0 0
        %546 = vmatprep.subr.bf16.mxu0 0
        %547 = vmatpush2.bf16.msra.mxu0 0
        %548 = vmatprep.subr.bf16.mxu0 0
        %549 = vmatpush2.bf16.msra.mxu0 0
        %550 = vmatprep.subr.bf16.mxu0 0
        %551 = vmatpush2.bf16.msra.mxu0 0
        %552 = vmatprep.mubr.bf16.mxu0 0
        %553 = vmatmul.mubr.bf16.gmra.mxu0 %v515
        %v554 = vpop.f32.mrf.mxu0
        %v555 = vadd.f32 %v419, %v554
        %v556 = vpop.f32.mrf.mxu0
        %v557 = vpop.f32.mrf.mxu0
        %v558 = vpop.f32.mrf.mxu0
        %559 = vdwg.mxu0
        %v561 = vsel %vm420, %v268, 0
        %v564 = vsel %vm424, %v411, 0
        %566 = vmatprep.subr.bf16.mxu0 0
        %567 = vmatpush1.bf16.msra.mxu0 0
        %568 = vmatprep.subr.bf16.mxu0 0
        %569 = vmatpush1.bf16.msra.mxu0 0
        %570 = vmatprep.subr.bf16.mxu0 0
        %571 = vmatpush1.bf16.msra.mxu0 0
        %572 = vmatprep.subr.bf16.mxu0 0
        %573 = vmatpush1.bf16.msra.mxu0 0
        %574 = vmatprep.subr.bf16.mxu0 0
        %575 = vmatpush1.bf16.msra.mxu0 0
        %576 = vmatprep.subr.bf16.mxu0 0
        %577 = vmatpush1.bf16.msra.mxu0 0
        %578 = vmatprep.subr.bf16.mxu0 0
        %579 = vmatpush1.bf16.msra.mxu0 0
        %580 = vmatprep.subr.bf16.mxu0 0
        %581 = vmatpush1.bf16.msra.mxu0 %v564
        %582 = vmatprep.subr.bf16.mxu0 0
        %583 = vmatpush2.bf16.msra.mxu0 0
        %584 = vmatprep.subr.bf16.mxu0 0
        %585 = vmatpush2.bf16.msra.mxu0 0
        %586 = vmatprep.subr.bf16.mxu0 0
        %587 = vmatpush2.bf16.msra.mxu0 0
        %588 = vmatprep.subr.bf16.mxu0 0
        %589 = vmatpush2.bf16.msra.mxu0 0
        %590 = vmatprep.subr.bf16.mxu0 0
        %591 = vmatpush2.bf16.msra.mxu0 0
        %592 = vmatprep.subr.bf16.mxu0 0
        %593 = vmatpush2.bf16.msra.mxu0 0
        %594 = vmatprep.subr.bf16.mxu0 0
        %595 = vmatpush2.bf16.msra.mxu0 0
        %596 = vmatprep.subr.bf16.mxu0 0
        %597 = vmatpush2.bf16.msra.mxu0 0
        %598 = vmatprep.mubr.bf16.mxu0 0
        %599 = vmatmul.mubr.bf16.gmra.mxu0 %v561
        %v600 = vpop.f32.mrf.mxu0
        %v601 = vadd.f32 %v419, %v600
        %v602 = vpop.f32.mrf.mxu0
        %v603 = vpop.f32.mrf.mxu0
        %v604 = vpop.f32.mrf.mxu0
        %605 = vdwg.mxu0
        %v607 = vsel %vm420, %v269, 0
        %v610 = vsel %vm424, %v412, 0
        %612 = vmatprep.subr.bf16.mxu0 0
        %613 = vmatpush1.bf16.msra.mxu0 0
        %614 = vmatprep.subr.bf16.mxu0 0
        %615 = vmatpush1.bf16.msra.mxu0 0
        %616 = vmatprep.subr.bf16.mxu0 0
        %617 = vmatpush1.bf16.msra.mxu0 0
        %618 = vmatprep.subr.bf16.mxu0 0
        %619 = vmatpush1.bf16.msra.mxu0 0
        %620 = vmatprep.subr.bf16.mxu0 0
        %621 = vmatpush1.bf16.msra.mxu0 0
        %622 = vmatprep.subr.bf16.mxu0 0
        %623 = vmatpush1.bf16.msra.mxu0 0
        %624 = vmatprep.subr.bf16.mxu0 0
        %625 = vmatpush1.bf16.msra.mxu0 0
        %626 = vmatprep.subr.bf16.mxu0 0
        %627 = vmatpush1.bf16.msra.mxu0 %v610
        %628 = vmatprep.subr.bf16.mxu0 0
        %629 = vmatpush2.bf16.msra.mxu0 0
        %630 = vmatprep.subr.bf16.mxu0 0
        %631 = vmatpush2.bf16.msra.mxu0 0
        %632 = vmatprep.subr.bf16.mxu0 0
        %633 = vmatpush2.bf16.msra.mxu0 0
        %634 = vmatprep.subr.bf16.mxu0 0
        %635 = vmatpush2.bf16.msra.mxu0 0
        %636 = vmatprep.subr.bf16.mxu0 0
        %637 = vmatpush2.bf16.msra.mxu0 0
        %638 = vmatprep.subr.bf16.mxu0 0
        %639 = vmatpush2.bf16.msra.mxu0 0
        %640 = vmatprep.subr.bf16.mxu0 0
        %641 = vmatpush2.bf16.msra.mxu0 0
        %642 = vmatprep.subr.bf16.mxu0 0
        %643 = vmatpush2.bf16.msra.mxu0 0
        %644 = vmatprep.mubr.bf16.mxu0 0
        %645 = vmatmul.mubr.bf16.gmra.mxu0 %v607
        %v646 = vpop.f32.mrf.mxu0
        %v647 = vadd.f32 %v419, %v646
        %v648 = vpop.f32.mrf.mxu0
        %v649 = vpop.f32.mrf.mxu0
        %v650 = vpop.f32.mrf.mxu0
        %651 = vdwg.mxu0
        %v653 = vsel %vm420, %v270, 0
        %v656 = vsel %vm424, %v413, 0
        %658 = vmatprep.subr.bf16.mxu0 0
        %659 = vmatpush1.bf16.msra.mxu0 0
        %660 = vmatprep.subr.bf16.mxu0 0
        %661 = vmatpush1.bf16.msra.mxu0 0
        %662 = vmatprep.subr.bf16.mxu0 0
        %663 = vmatpush1.bf16.msra.mxu0 0
        %664 = vmatprep.subr.bf16.mxu0 0
        %665 = vmatpush1.bf16.msra.mxu0 0
        %666 = vmatprep.subr.bf16.mxu0 0
        %667 = vmatpush1.bf16.msra.mxu0 0
        %668 = vmatprep.subr.bf16.mxu0 0
        %669 = vmatpush1.bf16.msra.mxu0 0
        %670 = vmatprep.subr.bf16.mxu0 0
        %671 = vmatpush1.bf16.msra.mxu0 0
        %672 = vmatprep.subr.bf16.mxu0 0
        %673 = vmatpush1.bf16.msra.mxu0 %v656
        %674 = vmatprep.subr.bf16.mxu0 0
        %675 = vmatpush2.bf16.msra.mxu0 0
        %676 = vmatprep.subr.bf16.mxu0 0
        %677 = vmatpush2.bf16.msra.mxu0 0
        %678 = vmatprep.subr.bf16.mxu0 0
        %679 = vmatpush2.bf16.msra.mxu0 0
        %680 = vmatprep.subr.bf16.mxu0 0
        %681 = vmatpush2.bf16.msra.mxu0 0
        %682 = vmatprep.subr.bf16.mxu0 0
        %683 = vmatpush2.bf16.msra.mxu0 0
        %684 = vmatprep.subr.bf16.mxu0 0
        %685 = vmatpush2.bf16.msra.mxu0 0
        %686 = vmatprep.subr.bf16.mxu0 0
        %687 = vmatpush2.bf16.msra.mxu0 0
        %688 = vmatprep.subr.bf16.mxu0 0
        %689 = vmatpush2.bf16.msra.mxu0 0
        %690 = vmatprep.mubr.bf16.mxu0 0
        %691 = vmatmul.mubr.bf16.gmra.mxu0 %v653
        %v692 = vpop.f32.mrf.mxu0
        %v693 = vadd.f32 %v419, %v692
        %v694 = vpop.f32.mrf.mxu0
        %v695 = vpop.f32.mrf.mxu0
        %v696 = vpop.f32.mrf.mxu0
        %697 = vdwg.mxu0
        %v699 = vsel %vm420, %v271, 0
        %v702 = vsel %vm424, %v414, 0
        %704 = vmatprep.subr.bf16.mxu0 0
        %705 = vmatpush1.bf16.msra.mxu0 0
        %706 = vmatprep.subr.bf16.mxu0 0
        %707 = vmatpush1.bf16.msra.mxu0 0
        %708 = vmatprep.subr.bf16.mxu0 0
        %709 = vmatpush1.bf16.msra.mxu0 0
        %710 = vmatprep.subr.bf16.mxu0 0
        %711 = vmatpush1.bf16.msra.mxu0 0
        %712 = vmatprep.subr.bf16.mxu0 0
        %713 = vmatpush1.bf16.msra.mxu0 0
        %714 = vmatprep.subr.bf16.mxu0 0
        %715 = vmatpush1.bf16.msra.mxu0 0
        %716 = vmatprep.subr.bf16.mxu0 0
        %717 = vmatpush1.bf16.msra.mxu0 0
        %718 = vmatprep.subr.bf16.mxu0 0
        %719 = vmatpush1.bf16.msra.mxu0 %v702
        %720 = vmatprep.subr.bf16.mxu0 0
        %721 = vmatpush2.bf16.msra.mxu0 0
        %722 = vmatprep.subr.bf16.mxu0 0
        %723 = vmatpush2.bf16.msra.mxu0 0
        %724 = vmatprep.subr.bf16.mxu0 0
        %725 = vmatpush2.bf16.msra.mxu0 0
        %726 = vmatprep.subr.bf16.mxu0 0
        %727 = vmatpush2.bf16.msra.mxu0 0
        %728 = vmatprep.subr.bf16.mxu0 0
        %729 = vmatpush2.bf16.msra.mxu0 0
        %730 = vmatprep.subr.bf16.mxu0 0
        %731 = vmatpush2.bf16.msra.mxu0 0
        %732 = vmatprep.subr.bf16.mxu0 0
        %733 = vmatpush2.bf16.msra.mxu0 0
        %734 = vmatprep.subr.bf16.mxu0 0
        %735 = vmatpush2.bf16.msra.mxu0 0
        %736 = vmatprep.mubr.bf16.mxu0 0
        %737 = vmatmul.mubr.bf16.gmra.mxu0 %v699
        %v738 = vpop.f32.mrf.mxu0
        %v739 = vadd.f32 %v419, %v738
        %v740 = vpop.f32.mrf.mxu0
        %v741 = vpop.f32.mrf.mxu0
        %v742 = vpop.f32.mrf.mxu0
        %743 = vdwg.mxu0
        %v745 = vsel %vm420, %v272, 0
        %v748 = vsel %vm424, %v415, 0
        %750 = vmatprep.subr.bf16.mxu0 0
        %751 = vmatpush1.bf16.msra.mxu0 0
        %752 = vmatprep.subr.bf16.mxu0 0
        %753 = vmatpush1.bf16.msra.mxu0 0
        %754 = vmatprep.subr.bf16.mxu0 0
        %755 = vmatpush1.bf16.msra.mxu0 0
        %756 = vmatprep.subr.bf16.mxu0 0
        %757 = vmatpush1.bf16.msra.mxu0 0
        %758 = vmatprep.subr.bf16.mxu0 0
        %759 = vmatpush1.bf16.msra.mxu0 0
        %760 = vmatprep.subr.bf16.mxu0 0
        %761 = vmatpush1.bf16.msra.mxu0 0
        %762 = vmatprep.subr.bf16.mxu0 0
        %763 = vmatpush1.bf16.msra.mxu0 0
        %764 = vmatprep.subr.bf16.mxu0 0
        %765 = vmatpush1.bf16.msra.mxu0 %v748
        %766 = vmatprep.subr.bf16.mxu0 0
        %767 = vmatpush2.bf16.msra.mxu0 0
        %768 = vmatprep.subr.bf16.mxu0 0
        %769 = vmatpush2.bf16.msra.mxu0 0
        %770 = vmatprep.subr.bf16.mxu0 0
        %771 = vmatpush2.bf16.msra.mxu0 0
        %772 = vmatprep.subr.bf16.mxu0 0
        %773 = vmatpush2.bf16.msra.mxu0 0
        %774 = vmatprep.subr.bf16.mxu0 0
        %775 = vmatpush2.bf16.msra.mxu0 0
        %776 = vmatprep.subr.bf16.mxu0 0
        %777 = vmatpush2.bf16.msra.mxu0 0
        %778 = vmatprep.subr.bf16.mxu0 0
        %779 = vmatpush2.bf16.msra.mxu0 0
        %780 = vmatprep.subr.bf16.mxu0 0
        %781 = vmatpush2.bf16.msra.mxu0 0
        %782 = vmatprep.mubr.bf16.mxu0 0
        %783 = vmatmul.mubr.bf16.gmra.mxu0 %v745
        %v784 = vpop.f32.mrf.mxu0
        %v785 = vadd.f32 %v419, %v784
        %v786 = vpop.f32.mrf.mxu0
        %v787 = vpop.f32.mrf.mxu0
        %v788 = vpop.f32.mrf.mxu0
        %789 = vdwg.mxu0
        %v790 = vmax.f32 %v463, 0.0
        %v791 = vmax.f32 %v509, 0.0
        %v792 = vmax.f32 %v555, 0.0
        %v793 = vmax.f32 %v601, 0.0
        %v794 = vmax.f32 %v647, 0.0
        %v795 = vmax.f32 %v693, 0.0
        %v796 = vmax.f32 %v739, 0.0
        %v797 = vmax.f32 %v785, 0.0
        %v798 = vlaneseq
        %v799 = vshrl.u32 %v798, 7
        %v800 = vsub.s32 0, %v799
        %v801 = vrot.slane %v281, %v800
        %803 = vbcast.lane.b32.xlu0 %v801, 256
        %v804 = vpop.permute.xlu0 %803
        %v805 = vlaneseq
        %v806 = vshrl.u32 %v805, 7
        %v807 = vsub.s32 1, %v806
        %v808 = vrot.slane %v281, %v807
        %810 = vbcast.lane.b32.xlu0 %v808, 256
        %v811 = vpop.permute.xlu0 %810
        %v812 = vlaneseq
        %v813 = vshrl.u32 %v812, 7
        %v814 = vsub.s32 2, %v813
        %v815 = vrot.slane %v281, %v814
        %817 = vbcast.lane.b32.xlu0 %v815, 256
        %v818 = vpop.permute.xlu0 %817
        %v819 = vlaneseq
        %v820 = vshrl.u32 %v819, 7
        %v821 = vsub.s32 3, %v820
        %v822 = vrot.slane %v281, %v821
        %824 = vbcast.lane.b32.xlu0 %v822, 256
        %v825 = vpop.permute.xlu0 %824
        %v826 = vlaneseq
        %v827 = vshrl.u32 %v826, 7
        %v828 = vsub.s32 4, %v827
        %v829 = vrot.slane %v281, %v828
        %831 = vbcast.lane.b32.xlu0 %v829, 256
        %v832 = vpop.permute.xlu0 %831
        %v833 = vlaneseq
        %v834 = vshrl.u32 %v833, 7
        %v835 = vsub.s32 5, %v834
        %v836 = vrot.slane %v281, %v835
        %838 = vbcast.lane.b32.xlu0 %v836, 256
        %v839 = vpop.permute.xlu0 %838
        %v840 = vlaneseq
        %v841 = vshrl.u32 %v840, 7
        %v842 = vsub.s32 6, %v841
        %v843 = vrot.slane %v281, %v842
        %845 = vbcast.lane.b32.xlu0 %v843, 256
        %v846 = vpop.permute.xlu0 %845
        %v847 = vlaneseq
        %v848 = vshrl.u32 %v847, 7
        %v849 = vsub.s32 7, %v848
        %v850 = vrot.slane %v281, %v849
        %852 = vbcast.lane.b32.xlu0 %v850, 256
        %v853 = vpop.permute.xlu0 %852
        %v854 = vmul.f32 %v804, %v790
        %v855 = vmul.f32 %v811, %v791
        %v856 = vmul.f32 %v818, %v792
        %v857 = vmul.f32 %v825, %v793
        %v858 = vmul.f32 %v832, %v794
        %v859 = vmul.f32 %v839, %v795
        %v860 = vmul.f32 %v846, %v796
        %v861 = vmul.f32 %v853, %v797
        %v862 = vrot.slane %v854, 4
        %v863 = vadd.f32 %v854, %v862
        %v864 = vrot.slane %v863, 2
        %v865 = vadd.f32 %v863, %v864
        %v866 = vrot.slane %v865, 1
        %v867 = vadd.f32 %v865, %v866
        %v868 = vrot.slane %v855, 4
        %v869 = vadd.f32 %v855, %v868
        %v870 = vrot.slane %v869, 2
        %v871 = vadd.f32 %v869, %v870
        %v872 = vrot.slane %v871, 1
        %v873 = vadd.f32 %v871, %v872
        %v874 = vrot.slane %v856, 4
        %v875 = vadd.f32 %v856, %v874
        %v876 = vrot.slane %v875, 2
        %v877 = vadd.f32 %v875, %v876
        %v878 = vrot.slane %v877, 1
        %v879 = vadd.f32 %v877, %v878
        %v880 = vrot.slane %v857, 4
        %v881 = vadd.f32 %v857, %v880
        %v882 = vrot.slane %v881, 2
        %v883 = vadd.f32 %v881, %v882
        %v884 = vrot.slane %v883, 1
        %v885 = vadd.f32 %v883, %v884
        %v886 = vrot.slane %v858, 4
        %v887 = vadd.f32 %v858, %v886
        %v888 = vrot.slane %v887, 2
        %v889 = vadd.f32 %v887, %v888
        %v890 = vrot.slane %v889, 1
        %v891 = vadd.f32 %v889, %v890
        %v892 = vrot.slane %v859, 4
        %v893 = vadd.f32 %v859, %v892
        %v894 = vrot.slane %v893, 2
        %v895 = vadd.f32 %v893, %v894
        %v896 = vrot.slane %v895, 1
        %v897 = vadd.f32 %v895, %v896
        %v898 = vrot.slane %v860, 4
        %v899 = vadd.f32 %v860, %v898
        %v900 = vrot.slane %v899, 2
        %v901 = vadd.f32 %v899, %v900
        %v902 = vrot.slane %v901, 1
        %v903 = vadd.f32 %v901, %v902
        %v904 = vrot.slane %v861, 4
        %v905 = vadd.f32 %v861, %v904
        %v906 = vrot.slane %v905, 2
        %v907 = vadd.f32 %v905, %v906
        %v908 = vrot.slane %v907, 1
        %v909 = vadd.f32 %v907, %v908
        %v910 = vpack.c.bf16 %v867, %v867
        %v911 = vpack.c.bf16 %v873, %v873
        %v912 = vpack.c.bf16 %v879, %v879
        %v913 = vpack.c.bf16 %v885, %v885
        %v914 = vpack.c.bf16 %v891, %v891
        %v915 = vpack.c.bf16 %v897, %v897
        %v916 = vpack.c.bf16 %v903, %v903
        %v917 = vpack.c.bf16 %v909, %v909
        %v918 = vlaneseq
        %v919 = vshrl.u32 %v918, 7
        %v920 = vsub.s32 0, %v919
        %v921 = vrot.slane %v301, %v920
        %v930 = vunpack.c.l.b16 %v910
        %v931 = vunpack.c.l.b16 %v911
        %v932 = vunpack.c.l.b16 %v912
        %v933 = vunpack.c.l.b16 %v913
        %v934 = vunpack.c.l.b16 %v914
        %v935 = vunpack.c.l.b16 %v915
        %v936 = vunpack.c.l.b16 %v916
        %v937 = vunpack.c.l.b16 %v917
        %vm938 = vcmask 1041409
        %v939 = vsel %vm938, %v931, %v930
        %vm940 = vcmask 1042434
        %v941 = vsel %vm940, %v932, %v939
        %vm942 = vcmask 1043459
        %v943 = vsel %vm942, %v933, %v941
        %vm944 = vcmask 1044484
        %v945 = vsel %vm944, %v934, %v943
        %vm946 = vcmask 1045509
        %v947 = vsel %vm946, %v935, %v945
        %vm948 = vcmask 1046534
        %v949 = vsel %vm948, %v936, %v947
        %vm950 = vcmask 1047559
        %v951 = vsel %vm950, %v937, %v949
        %v952 = vpack.c.b16 %v951, %v951
        %v970 = vunpack.c.l.b16 %v284
        %v971 = vunpack.c.l.b16 %v285
        %v972 = vunpack.c.l.b16 %v286
        %v973 = vunpack.c.l.b16 %v287
        %v974 = vunpack.c.l.b16 %v288
        %v975 = vunpack.c.l.b16 %v289
        %v976 = vunpack.c.l.b16 %v290
        %v977 = vunpack.c.l.b16 %v291
        %v978 = vunpack.c.l.b16 %v292
        %v979 = vunpack.c.l.b16 %v293
        %v980 = vunpack.c.l.b16 %v294
        %v981 = vunpack.c.l.b16 %v295
        %v982 = vunpack.c.l.b16 %v296
        %v983 = vunpack.c.l.b16 %v297
        %v984 = vunpack.c.l.b16 %v298
        %v985 = vunpack.c.l.b16 %v299
        %v986 = vpack.c.b16 %v971, %v970
        %v987 = vpack.c.b16 %v973, %v972
        %v988 = vpack.c.b16 %v975, %v974
        %v989 = vpack.c.b16 %v977, %v976
        %v990 = vpack.c.b16 %v979, %v978
        %v991 = vpack.c.b16 %v981, %v980
        %v992 = vpack.c.b16 %v983, %v982
        %v993 = vpack.c.b16 %v985, %v984
        %1002 = vmatprep.subr.bf16.mxu0 0
        %1003 = vmatpush1.bf16.msra.mxu0 %v993
        %1004 = vmatprep.subr.bf16.mxu0 0
        %1005 = vmatpush1.bf16.msra.mxu0 %v992
        %1006 = vmatprep.subr.bf16.mxu0 0
        %1007 = vmatpush1.bf16.msra.mxu0 %v991
        %1008 = vmatprep.subr.bf16.mxu0 0
        %1009 = vmatpush1.bf16.msra.mxu0 %v990
        %1010 = vmatprep.subr.bf16.mxu0 0
        %1011 = vmatpush1.bf16.msra.mxu0 %v989
        %1012 = vmatprep.subr.bf16.mxu0 0
        %1013 = vmatpush1.bf16.msra.mxu0 %v988
        %1014 = vmatprep.subr.bf16.mxu0 0
        %1015 = vmatpush1.bf16.msra.mxu0 %v987
        %1016 = vmatprep.subr.bf16.mxu0 0
        %1017 = vmatpush1.bf16.msra.mxu0 %v986
        %1018 = vmatprep.subr.bf16.mxu0 0
        %1019 = vmatpush2.bf16.msra.mxu0 0
        %1020 = vmatprep.subr.bf16.mxu0 0
        %1021 = vmatpush2.bf16.msra.mxu0 0
        %1022 = vmatprep.subr.bf16.mxu0 0
        %1023 = vmatpush2.bf16.msra.mxu0 0
        %1024 = vmatprep.subr.bf16.mxu0 0
        %1025 = vmatpush2.bf16.msra.mxu0 0
        %1026 = vmatprep.subr.bf16.mxu0 0
        %1027 = vmatpush2.bf16.msra.mxu0 0
        %1028 = vmatprep.subr.bf16.mxu0 0
        %1029 = vmatpush2.bf16.msra.mxu0 0
        %1030 = vmatprep.subr.bf16.mxu0 0
        %1031 = vmatpush2.bf16.msra.mxu0 0
        %1032 = vmatprep.subr.bf16.mxu0 0
        %1033 = vmatpush2.bf16.msra.mxu0 0
        %1034 = vmatprep.mubr.bf16.mxu0 0
        %1035 = vmatmul.mubr.bf16.gmra.mxu0 %v952
        %v1036 = vpop.f32.mrf.mxu0
        %v1037 = vadd.f32 %v921, %v1036
        %v1038 = vpop.f32.mrf.mxu0
        %v1039 = vpop.f32.mrf.mxu0
        %v1040 = vpop.f32.mrf.mxu0
        %1041 = vdwg.mxu0
        %v1042 = vmax.f32 %v1037, 0.0
        %v1043 = vlaneseq
        %v1044 = vshrl.u32 %v1043, 7
        %v1045 = vsub.s32 0, %v1044
        %v1046 = vrot.slane %v302, %v1045
        %v1047 = vmul.f32 %v1042, %v1046
        %1048 = vadd.xlane.f32.xlu0 %v1047
        %v1049 = vpop.xlane.xlu0 %1048
        %v1050 = vlaneseq
        %v1051 = vshrl.u32 %v1050, 7
        %v1052 = vsub.s32 0, %v1051
        %v1053 = vrot.slane %v303, %v1052
        %v1054 = vadd.f32 %v1049, %v1053
        %v1055 = vxor.u32 %v1054, 2147483648
        %v1056 = vmul.f32 %v1055, 1.442695
        %v1057 = vpow.pop %v1056
        %v1058 = vadd.f32 %v1057, 1.0
        %v1059 = vrcp.pop %v1058
        %v1060 = vmul.f32 1.0, %v1059
        %1061 = vst [vmem:[%s247] sm:$0xff] %v1060
        %s1062 = sand.u32 %s147, 1
        %s1063 = scalar_lea.sflag [#allocation3], %s1062
        %s1064 = sand.u32 %s147, 1
        %s1065 = smul.addr %s1064, 8
        %s1066 = scalar_lea.vmem [#allocation2], %s1065
        // Predicated region
        $region41: #{tpu_custom_call.1} parent=39 // pred_check
          %p1067 = pneg %p157
        $region42: #{tpu_custom_call.1} parent=39 // pred_check_branch
          %1069 = sbr.rel (%p1067) target = $region44
        $region43: #{tpu_custom_call.1} parent=39 // pred_region
          %s1071 = ssub.s32 128, 128
          %1072 = vsyncadd %s1063, %s1071
          %s1073 = smul.addr %s19, 128
          %s1074 = scalar_lea.hbm %s5, %s1073
          %s1076 = sshll.u32 %s1066, 4
          %s1077 = int_to_ptr.vmem [resolvable:$true] %s1076
          %1079 = dma.vmem_to_hbm [thread:$0]  %s1077, 128, %s1074, %s1063
        $region44: #{tpu_custom_call.1} parent=39 // pred_fallthru
          _
      $region40: #{tpu_custom_call.1} parent=5 // pred_fallthru
        _
      %p1080 = scmp.le.s32.totalorder 2, %s14
      // Predicated region
      $region45: #{tpu_custom_call.1} parent=5 // pred_check
        %p1081 = pneg %p1080
      $region46: #{tpu_custom_call.1} parent=5 // pred_check_branch
        %1083 = sbr.rel (%p1081) target = $region48
      $region47: #{tpu_custom_call.1} parent=5 // pred_region
        %s1084 = ssub.s32 %s14, 2
        // Predicated region
        $region49: #{tpu_custom_call.1} parent=47 // pred_check
          %p1085 = pneg %p163
        $region50: #{tpu_custom_call.1} parent=47 // pred_check_branch
          %1087 = sbr.rel (%p1085) target = $region52
        $region51: #{tpu_custom_call.1} parent=47 // pred_region
          %s1088 = sand.u32 %s148, 1
          %s1089 = scalar_lea.sflag [#allocation3], %s1088
          %s1090 = sand.u32 %s148, 1
          %s1091 = smul.addr %s1090, 8
          %s1092 = scalar_lea.vmem [#allocation2], %s1091
          %1093 = dma.done %s1089, 128
        $region52: #{tpu_custom_call.1} parent=47 // pred_fallthru
          _
      $region48: #{tpu_custom_call.1} parent=5 // pred_fallthru
        _
    $region6: #{tpu_custom_call.1} parent=1 // loop_footer
      %s18 = sadd.s32 1, %s14
    $region7: #{tpu_custom_call.1} parent=1 // loop_footer_branch
      %13 = sbr.rel target = $region3
    $region8: #{tpu_custom_call.1} parent=1 // loop_exit
      _
    %1094 = vsyncpa [#allocation3], 1
    %s1095 = scalar_lea.sflag [#allocation3], 1
    %1096 = vsyncpa %s1095, 1

</llo_original>
